<compile_context>
chip_gen: v7x
topology: tpu7x:2x2x1
jax: 0.10.0
libtpu: 0.0.40
codegen_flags: <defaults>
</compile_context>

<pallas_src>
import functools

import jax
import jax.numpy as jnp
from jax.experimental import pallas as pl
from jax.experimental.pallas import tpu as pltpu


def _round_up(v, m):
    return ((v + m - 1) // m) * m


def _num_tensorcores():
    """Best-effort TensorCore count per chip (v7x has 2, v5e/v6e have 1)."""
    try:
        kind = jax.devices()[0].device_kind.lower()
        if "v7" in kind or "7x" in kind:
            return 2
    except Exception:
        pass
    return 1


def _mlp_kernel(n_hidden, compute_dtype, *refs):
    """refs = (x, W1', b1', W2, b2, ..., Wk, bk, Wout, bout, out).

    BatchNorm is already folded into (W1', b1') by the wrapper, so the body is
    just the Linear/Tanh chain.  Matmul operands are bf16 (MXU, f32 acc);
    bias add + tanh run in f32 (VPU/EUP) with one cast back per layer.
    """
    x_ref = refs[0]
    wb = refs[1:-1]
    o_ref = refs[-1]

    h = x_ref[...]                                        # bf16 activations
    for i in range(n_hidden):
        acc = jnp.dot(h, wb[2 * i][...], preferred_element_type=jnp.float32)
        h = jnp.tanh(acc + wb[2 * i + 1][...]).astype(compute_dtype)

    acc = jnp.dot(h, wb[-2][...], preferred_element_type=jnp.float32)
    o_ref[...] = (acc + wb[-1][...]).astype(o_ref.dtype)


def prepare_params(gamma, beta, weights, biases, *, compute_dtype=jnp.bfloat16):
    """Pad & cast the parameters ONCE (outside the per-call forward).

    Layer 0's weight stays in f32 and un-scaled because the BatchNorm fold
    depends on per-call batch statistics; all other weights are pre-cast to
    the MXU operand dtype.  Lane (output) dims are padded to multiples of 128
    so every matmul N and the final store are lane-dense; the input feature
    dim d0 is left unpadded (x ships as-is).
    """
    d0 = int(weights[0].shape[0])
    dims = [d0] + [int(w.shape[1]) for w in weights]
    dims_p = [d0] + [_round_up(d, 128) for d in dims[1:]]

    # Layer 0 weight: pad output dim only, keep f32 for the per-call BN fold.
    w0 = jnp.zeros((d0, dims_p[1]), jnp.float32)
    w0 = w0.at[:, :dims[1]].set(weights[0].astype(jnp.float32))
    w_pad = [w0]
    for li in range(1, len(weights)):
        din, dout = dims[li], dims[li + 1]
        dinp, doutp = dims_p[li], dims_p[li + 1]
        wp = jnp.zeros((dinp, doutp), compute_dtype)
        wp = wp.at[:din, :dout].set(weights[li].astype(compute_dtype))
        w_pad.append(wp)

    b_pad = []
    for li, b in enumerate(biases):
        dout, doutp = dims[li + 1], dims_p[li + 1]
        bp = jnp.zeros((1, doutp), jnp.float32)
        bp = bp.at[:, :dout].set(b.reshape(1, dout).astype(jnp.float32))
        b_pad.append(bp)

    return dict(
        gamma=gamma.reshape(1, d0).astype(jnp.float32),
        beta=beta.reshape(1, d0).astype(jnp.float32),
        w_pad=w_pad, b_pad=b_pad,
        dims=dims, dims_p=dims_p, num_actions=dims[-1],
    )


def mlp_network_forward(x, params, *, compute_dtype=jnp.bfloat16, block_m=512):
    """MLPNetwork forward pass (training-mode BatchNorm, batch statistics).

    Args:
      x:       (batch, *state_shape) float32
      params:  output of prepare_params()
      block_m: upper bound on batch-tile rows per grid step
    Returns:
      (batch, num_actions) float32
    """
    dims, dims_p = params["dims"], params["dims_p"]
    d0, num_actions = dims[0], params["num_actions"]
    n_hidden = len(params["w_pad"]) - 1
    n_out_p = dims_p[-1]

    batch = x.shape[0]
    x2d = x.reshape(batch, -1).astype(jnp.float32)          # nn.Flatten()

    # BatchNorm1d (training mode): full-batch stats, biased variance, eps=1e-5,
    # computed over the UNPADDED batch and folded into the first Linear layer.
    mean = jnp.mean(x2d, axis=0, keepdims=True)
    var = jnp.mean(jnp.square(x2d - mean), axis=0, keepdims=True)
    inv = jax.lax.rsqrt(var + 1e-5)
    scale = params["gamma"] * inv                            # (1, d0)
    shift = params["beta"] - mean * scale                    # (1, d0)

    w0 = params["w_pad"][0]                                  # (d0, d1p) f32
    w0_folded = (scale.reshape(d0, 1) * w0).astype(compute_dtype)
    b0_folded = shift @ w0 + params["b_pad"][0]              # (1, d1p) f32

    # ---- batch-tile selection: VMEM budget + multi-TC sharding --------------
    # bf16 activations -> keep the sublane tile a multiple of 16.
    bm = min(_round_up(block_m, 16), _round_up(batch, 16))
    if _num_tensorcores() >= 2 and batch > 16:
        # On v7x the "parallel" axis shards across 2 TensorCores; never
        # collapse the grid to a single step there.
        bm = min(bm, _round_up(pl.cdiv(batch, 2), 16))

    param_bytes = (
        int(w0_folded.size) * w0_folded.dtype.itemsize
        + sum(int(w.size) * w.dtype.itemsize for w in params["w_pad"][1:])
        + int(b0_folded.size) * 4
        + sum(int(b.size) * 4 for b in params["b_pad"][1:])
    )

    def vmem_needed(bm_):
        x_tile = 2 * bm_ * d0 * 2            # double-buffered bf16 input tiles
        o_tile = 2 * bm_ * n_out_p * 4       # double-buffered f32 output tiles
        act = bm_ * max(dims_p[1:]) * 4      # widest live f32 activation
        return param_bytes + x_tile + o_tile + act

    VMEM_BUDGET = 44 << 20                   # fits v7x's 64 MiB with headroom
    while bm > 16 and vmem_needed(bm) > VMEM_BUDGET:
        bm = max(16, _round_up(bm // 2, 16))
    batch_p = _round_up(batch, bm)

    # x is passed directly (no padded f32 copy in HBM); pad rows only if the
    # batch is not a multiple of the tile.
    xk = x2d.astype(compute_dtype)
    if batch_p != batch:
        xk = jnp.zeros((batch_p, d0), compute_dtype).at[:batch].set(xk)

    operands = [xk, w0_folded, b0_folded]
    for wi, bi in zip(params["w_pad"][1:], params["b_pad"][1:]):
        operands += [wi, bi]

    grid = (batch_p // bm,)

    def build_in_specs(use_buffered):
        def resident(shape):
            # Constant index_map => VMEM-resident across all grid steps;
            # single-buffer it so it doesn't waste 2x VMEM.
            if use_buffered:
                return pl.BlockSpec(shape, lambda i: (0, 0),
                                    pipeline_mode=pl.Buffered(1))
            return pl.BlockSpec(shape, lambda i: (0, 0))

        specs = [pl.BlockSpec((bm, d0), lambda i: (i, 0))]   # x (batch-tiled)
        specs.append(resident((d0, dims_p[1])))              # W1'
        specs.append(resident((1, dims_p[1])))                # b1'
        for li in range(1, len(params["w_pad"])):
            specs.append(resident((dims_p[li], dims_p[li + 1])))
            specs.append(resident((1, dims_p[li + 1])))
        return specs

    out_spec = pl.BlockSpec((bm, n_out_p), lambda i: (i, 0))

    # Advisory cost estimate for the XLA scheduler.
    layer_flops = d0 * dims_p[1] + sum(
        dims_p[i] * dims_p[i + 1] for i in range(1, len(dims_p) - 1))
    flops = 2 * batch_p * layer_flops
    transcendentals = batch_p * sum(dims_p[1:-1])
    bytes_accessed = int(xk.size) * 2 + batch_p * n_out_p * 4 + param_bytes

    kernel = functools.partial(_mlp_kernel, n_hidden, compute_dtype)

    def run(use_buffered):
        return pl.pallas_call(
            kernel,
            out_shape=jax.ShapeDtypeStruct((batch_p, n_out_p), jnp.float32),
            grid=grid,
            in_specs=build_in_specs(use_buffered),
            out_specs=out_spec,
            compiler_params=pltpu.CompilerParams(
                dimension_semantics=("parallel",),
                vmem_limit_bytes=48 << 20),
            cost_estimate=pl.CostEstimate(
                flops=int(flops),
                transcendentals=int(transcendentals),
                bytes_accessed=int(bytes_accessed)),
        )(*operands)

    try:
        out_padded = run(True)
    except Exception:
        # Fallback for JAX versions where pipeline_mode=pl.Buffered(1) is not
        # accepted on top-level pallas_call BlockSpecs.  A genuine kernel bug
        # would still surface here (the fallback fails identically).
        out_padded = run(False)

    return out_padded[:batch, :num_actions]


def init_params(key, state_shape, mlp_layers, num_actions):
    """Deterministic parameter init (shapes match the PyTorch module)."""
    d0 = 1
    for s in state_shape:
        d0 *= s
    layer_dims = [d0] + list(mlp_layers)

    gamma = jnp.ones((1, d0), jnp.float32)   # BatchNorm1d weight
    beta = jnp.zeros((1, d0), jnp.float32)   # BatchNorm1d bias

    weights, biases = [], []
    dims_in_out = list(zip(layer_dims[:-1], layer_dims[1:])) + [
        (layer_dims[-1], num_actions)
    ]
    for (din, dout) in dims_in_out:
        key, kw, kb = jax.random.split(key, 3)
        bound = 1.0 / jnp.sqrt(jnp.float32(din))
        w = jax.random.uniform(kw, (din, dout), jnp.float32, -bound, bound)
        b = jax.random.uniform(kb, (1, dout), jnp.float32, -bound, bound)
        weights.append(w)
        biases.append(b)
    return gamma, beta, weights, biases


if __name__ == "__main__":
    # Small config consistent with the module:
    #   state_shape=[4, 16] -> flattened dim 64, mlp_layers=[32, 32], 2 actions
    batch = 32
    state_shape = [4, 16]
    mlp_layers = [32, 32]
    num_actions = 2

    key = jax.random.PRNGKey(0)
    key, kx = jax.random.split(key)
    x = jax.random.normal(kx, (batch, *state_shape), jnp.float32)

    gamma, beta, weights, biases = init_params(
        key, state_shape, mlp_layers, num_actions
    )

    # Parameters are padded / cast once, outside the per-call forward.
    params = prepare_params(gamma, beta, weights, biases,
                            compute_dtype=jnp.bfloat16)

    out = mlp_network_forward(x, params, compute_dtype=jnp.bfloat16,
                              block_m=512)
    out = jax.block_until_ready(out)

    assert out.shape == (batch, num_actions), out.shape
    assert out.dtype == jnp.float32

    # Pure-JAX reference with matched numerics (BN folded into the first
    # Linear, bf16 matmul operands, f32 accumulation / tanh), so the
    # comparison isolates the Pallas implementation rather than dtype policy.
    def ref_forward(x, gamma, beta, weights, biases, mm_dtype):
        h = x.reshape(x.shape[0], -1)
        mean = jnp.mean(h, axis=0, keepdims=True)
        var = jnp.mean((h - mean) ** 2, axis=0, keepdims=True)
        inv = jax.lax.rsqrt(var + 1e-5)
        scale = gamma.reshape(1, -1) * inv
        shift = beta.reshape(1, -1) - mean * scale
        w0 = scale.reshape(-1, 1) * weights[0]
        b0 = shift @ weights[0] + biases[0]
        h = jnp.tanh(jnp.dot(h.astype(mm_dtype), w0.astype(mm_dtype),
                             preferred_element_type=jnp.float32) + b0)
        for w, b in zip(weights[1:-1], biases[1:-1]):
            h = jnp.tanh(jnp.dot(h.astype(mm_dtype), w.astype(mm_dtype),
                                 preferred_element_type=jnp.float32) + b)
        return jnp.dot(h.astype(mm_dtype), weights[-1].astype(mm_dtype),
                       preferred_element_type=jnp.float32) + biases[-1]

    ref = ref_forward(x, gamma, beta, weights, biases, jnp.bfloat16)
    assert jnp.allclose(out, ref, atol=1e-2, rtol=1e-2), (out, ref)

    print("KERNEL_OK")
</pallas_src>

<mosaic_0001>
module attributes {stable_mosaic.version = 11 : i64} {
  func.func @_mlp_kernel(%arg0: i32, %arg1: memref<32x64xbf16, #tpu.memory_space<vmem>>, %arg2: memref<64x128xbf16, #tpu.memory_space<vmem>>, %arg3: memref<1x128xf32, #tpu.memory_space<vmem>>, %arg4: memref<128x128xbf16, #tpu.memory_space<vmem>>, %arg5: memref<1x128xf32, #tpu.memory_space<vmem>>, %arg6: memref<128x128xbf16, #tpu.memory_space<vmem>>, %arg7: memref<1x128xf32, #tpu.memory_space<vmem>>, %arg8: memref<32x128xf32, #tpu.memory_space<vmem>>) attributes {dimension_semantics = [#tpu.dimension_semantics<parallel>], iteration_bounds = array<i64: 1>, scalar_prefetch = 0 : i64, scratch_operands = 0 : i64, tpu.core_type = #tpu.core_type<tc>, window_params = [{transform_indices = @transform_0, window_bounds = array<i64: 32, 64>}, {pipeline_mode = #tpu.pipeline_mode<synchronous>, transform_indices = @transform_1, window_bounds = array<i64: 64, 128>}, {pipeline_mode = #tpu.pipeline_mode<synchronous>, transform_indices = @transform_2, window_bounds = array<i64: 1, 128>}, {pipeline_mode = #tpu.pipeline_mode<synchronous>, transform_indices = @transform_3, window_bounds = array<i64: 128, 128>}, {pipeline_mode = #tpu.pipeline_mode<synchronous>, transform_indices = @transform_4, window_bounds = array<i64: 1, 128>}, {pipeline_mode = #tpu.pipeline_mode<synchronous>, transform_indices = @transform_5, window_bounds = array<i64: 128, 128>}, {pipeline_mode = #tpu.pipeline_mode<synchronous>, transform_indices = @transform_6, window_bounds = array<i64: 1, 128>}, {transform_indices = @transform_7, window_bounds = array<i64: 32, 128>}]} {
    %c0 = arith.constant 0 : index
    %c0_0 = arith.constant 0 : index
    %0 = vector.load %arg1[%c0, %c0_0] : memref<32x64xbf16, #tpu.memory_space<vmem>>, vector<32x64xbf16>
    %c0_1 = arith.constant 0 : index
    %c0_2 = arith.constant 0 : index
    %1 = vector.load %arg2[%c0_1, %c0_2] : memref<64x128xbf16, #tpu.memory_space<vmem>>, vector<64x128xbf16>
    %cst = arith.constant dense<0.000000e+00> : vector<32x128xf32>
    %2 = tpu.matmul %0, %1, %cst {dimension_numbers = #tpu.dot_dimension_numbers<[1], [0], [0], [1], [0, 0, 1, 1], [], []>} : vector<32x64xbf16>, vector<64x128xbf16>, vector<32x128xf32> -> vector<32x128xf32>
    %c0_3 = arith.constant 0 : index
    %c0_4 = arith.constant 0 : index
    %3 = vector.load %arg3[%c0_3, %c0_4] : memref<1x128xf32, #tpu.memory_space<vmem>>, vector<1x128xf32>
    %4 = vector.broadcast %3 : vector<1x128xf32> to vector<32x128xf32>
    %5 = arith.addf %2, %4 : vector<32x128xf32>
    %6 = math.tanh %5 : vector<32x128xf32>
    %7 = arith.truncf %6 : vector<32x128xf32> to vector<32x128xbf16>
    %c0_5 = arith.constant 0 : index
    %c0_6 = arith.constant 0 : index
    %8 = vector.load %arg4[%c0_5, %c0_6] : memref<128x128xbf16, #tpu.memory_space<vmem>>, vector<128x128xbf16>
    %cst_7 = arith.constant dense<0.000000e+00> : vector<32x128xf32>
    %9 = tpu.matmul %7, %8, %cst_7 {dimension_numbers = #tpu.dot_dimension_numbers<[1], [0], [0], [1], [0, 0, 1, 1], [], []>} : vector<32x128xbf16>, vector<128x128xbf16>, vector<32x128xf32> -> vector<32x128xf32>
    %c0_8 = arith.constant 0 : index
    %c0_9 = arith.constant 0 : index
    %10 = vector.load %arg5[%c0_8, %c0_9] : memref<1x128xf32, #tpu.memory_space<vmem>>, vector<1x128xf32>
    %11 = vector.broadcast %10 : vector<1x128xf32> to vector<32x128xf32>
    %12 = arith.addf %9, %11 : vector<32x128xf32>
    %13 = math.tanh %12 : vector<32x128xf32>
    %14 = arith.truncf %13 : vector<32x128xf32> to vector<32x128xbf16>
    %c0_10 = arith.constant 0 : index
    %c0_11 = arith.constant 0 : index
    %15 = vector.load %arg6[%c0_10, %c0_11] : memref<128x128xbf16, #tpu.memory_space<vmem>>, vector<128x128xbf16>
    %cst_12 = arith.constant dense<0.000000e+00> : vector<32x128xf32>
    %16 = tpu.matmul %14, %15, %cst_12 {dimension_numbers = #tpu.dot_dimension_numbers<[1], [0], [0], [1], [0, 0, 1, 1], [], []>} : vector<32x128xbf16>, vector<128x128xbf16>, vector<32x128xf32> -> vector<32x128xf32>
    %c0_13 = arith.constant 0 : index
    %c0_14 = arith.constant 0 : index
    %17 = vector.load %arg7[%c0_13, %c0_14] : memref<1x128xf32, #tpu.memory_space<vmem>>, vector<1x128xf32>
    %18 = vector.broadcast %17 : vector<1x128xf32> to vector<32x128xf32>
    %19 = arith.addf %16, %18 : vector<32x128xf32>
    %c0_15 = arith.constant 0 : index
    %c0_16 = arith.constant 0 : index
    %20 = vector.load %arg8[%c0_15, %c0_16] : memref<32x128xf32, #tpu.memory_space<vmem>>, vector<32x128xf32>
    tpu.vector_store %arg8[%c0_15, %c0_16], %19 {strides = array<i32>} : memref<32x128xf32, #tpu.memory_space<vmem>>, vector<32x128xf32>,
    return
  }
  func.func @transform_0(%arg0: i32) -> (i32, i32) {
    %c0_i32 = arith.constant 0 : i32
    %c0_i32_0 = arith.constant 0 : i32
    return %arg0, %c0_i32 : i32, i32
  }
  func.func @transform_1(%arg0: i32) -> (i32, i32) {
    %c0_i32 = arith.constant 0 : i32
    %c0_i32_0 = arith.constant 0 : i32
    %c0_i32_1 = arith.constant 0 : i32
    return %c0_i32, %c0_i32_0 : i32, i32
  }
  func.func @transform_2(%arg0: i32) -> (i32, i32) {
    %c0_i32 = arith.constant 0 : i32
    %c0_i32_0 = arith.constant 0 : i32
    %c0_i32_1 = arith.constant 0 : i32
    return %c0_i32, %c0_i32_0 : i32, i32
  }
  func.func @transform_3(%arg0: i32) -> (i32, i32) {
    %c0_i32 = arith.constant 0 : i32
    %c0_i32_0 = arith.constant 0 : i32
    %c0_i32_1 = arith.constant 0 : i32
    return %c0_i32, %c0_i32_0 : i32, i32
  }
  func.func @transform_4(%arg0: i32) -> (i32, i32) {
    %c0_i32 = arith.constant 0 : i32
    %c0_i32_0 = arith.constant 0 : i32
    %c0_i32_1 = arith.constant 0 : i32
    return %c0_i32, %c0_i32_0 : i32, i32
  }
  func.func @transform_5(%arg0: i32) -> (i32, i32) {
    %c0_i32 = arith.constant 0 : i32
    %c0_i32_0 = arith.constant 0 : i32
    %c0_i32_1 = arith.constant 0 : i32
    return %c0_i32, %c0_i32_0 : i32, i32
  }
  func.func @transform_6(%arg0: i32) -> (i32, i32) {
    %c0_i32 = arith.constant 0 : i32
    %c0_i32_0 = arith.constant 0 : i32
    %c0_i32_1 = arith.constant 0 : i32
    return %c0_i32, %c0_i32_0 : i32, i32
  }
  func.func @transform_7(%arg0: i32) -> (i32, i32) {
    %c0_i32 = arith.constant 0 : i32
    %c0_i32_0 = arith.constant 0 : i32
    return %arg0, %c0_i32 : i32, i32
  }
}

module attributes {stable_mosaic.version = 11 : i64} {
  func.func @_mlp_kernel(%arg0: i32, %arg1: memref<32x64xbf16, #tpu.memory_space<vmem>>, %arg2: memref<64x128xbf16, #tpu.memory_space<vmem>>, %arg3: memref<1x128xf32, #tpu.memory_space<vmem>>, %arg4: memref<128x128xbf16, #tpu.memory_space<vmem>>, %arg5: memref<1x128xf32, #tpu.memory_space<vmem>>, %arg6: memref<128x128xbf16, #tpu.memory_space<vmem>>, %arg7: memref<1x128xf32, #tpu.memory_space<vmem>>, %arg8: memref<32x128xf32, #tpu.memory_space<vmem>>) attributes {dimension_semantics = [#tpu.dimension_semantics<parallel>], iteration_bounds = array<i64: 1>, scalar_prefetch = 0 : i64, scratch_operands = 0 : i64, tpu.core_type = #tpu.core_type<tc>, window_params = [{transform_indices = @transform_0, window_bounds = array<i64: 32, 64>}, {pipeline_mode = #tpu.pipeline_mode<synchronous>, transform_indices = @transform_1, window_bounds = array<i64: 64, 128>}, {pipeline_mode = #tpu.pipeline_mode<synchronous>, transform_indices = @transform_2, window_bounds = array<i64: 1, 128>}, {pipeline_mode = #tpu.pipeline_mode<synchronous>, transform_indices = @transform_3, window_bounds = array<i64: 128, 128>}, {pipeline_mode = #tpu.pipeline_mode<synchronous>, transform_indices = @transform_4, window_bounds = array<i64: 1, 128>}, {pipeline_mode = #tpu.pipeline_mode<synchronous>, transform_indices = @transform_5, window_bounds = array<i64: 128, 128>}, {pipeline_mode = #tpu.pipeline_mode<synchronous>, transform_indices = @transform_6, window_bounds = array<i64: 1, 128>}, {transform_indices = @transform_7, window_bounds = array<i64: 32, 128>}]} {
    %c0 = arith.constant 0 : index
    %c0_0 = arith.constant 0 : index
    %0 = vector.load %arg1[%c0, %c0_0] : memref<32x64xbf16, #tpu.memory_space<vmem>>, vector<32x64xbf16>
    %c0_1 = arith.constant 0 : index
    %c0_2 = arith.constant 0 : index
    %1 = vector.load %arg2[%c0_1, %c0_2] : memref<64x128xbf16, #tpu.memory_space<vmem>>, vector<64x128xbf16>
    %cst = arith.constant dense<0.000000e+00> : vector<32x128xf32>
    %2 = tpu.matmul %0, %1, %cst {dimension_numbers = #tpu.dot_dimension_numbers<[1], [0], [0], [1], [0, 0, 1, 1], [], []>} : vector<32x64xbf16>, vector<64x128xbf16>, vector<32x128xf32> -> vector<32x128xf32>
    %c0_3 = arith.constant 0 : index
    %c0_4 = arith.constant 0 : index
    %3 = vector.load %arg3[%c0_3, %c0_4] : memref<1x128xf32, #tpu.memory_space<vmem>>, vector<1x128xf32>
    %4 = vector.broadcast %3 : vector<1x128xf32> to vector<32x128xf32>
    %5 = arith.addf %2, %4 : vector<32x128xf32>
    %6 = math.tanh %5 : vector<32x128xf32>
    %7 = arith.truncf %6 : vector<32x128xf32> to vector<32x128xbf16>
    %c0_5 = arith.constant 0 : index
    %c0_6 = arith.constant 0 : index
    %8 = vector.load %arg4[%c0_5, %c0_6] : memref<128x128xbf16, #tpu.memory_space<vmem>>, vector<128x128xbf16>
    %cst_7 = arith.constant dense<0.000000e+00> : vector<32x128xf32>
    %9 = tpu.matmul %7, %8, %cst_7 {dimension_numbers = #tpu.dot_dimension_numbers<[1], [0], [0], [1], [0, 0, 1, 1], [], []>} : vector<32x128xbf16>, vector<128x128xbf16>, vector<32x128xf32> -> vector<32x128xf32>
    %c0_8 = arith.constant 0 : index
    %c0_9 = arith.constant 0 : index
    %10 = vector.load %arg5[%c0_8, %c0_9] : memref<1x128xf32, #tpu.memory_space<vmem>>, vector<1x128xf32>
    %11 = vector.broadcast %10 : vector<1x128xf32> to vector<32x128xf32>
    %12 = arith.addf %9, %11 : vector<32x128xf32>
    %13 = math.tanh %12 : vector<32x128xf32>
    %14 = arith.truncf %13 : vector<32x128xf32> to vector<32x128xbf16>
    %c0_10 = arith.constant 0 : index
    %c0_11 = arith.constant 0 : index
    %15 = vector.load %arg6[%c0_10, %c0_11] : memref<128x128xbf16, #tpu.memory_space<vmem>>, vector<128x128xbf16>
    %cst_12 = arith.constant dense<0.000000e+00> : vector<32x128xf32>
    %16 = tpu.matmul %14, %15, %cst_12 {dimension_numbers = #tpu.dot_dimension_numbers<[1], [0], [0], [1], [0, 0, 1, 1], [], []>} : vector<32x128xbf16>, vector<128x128xbf16>, vector<32x128xf32> -> vector<32x128xf32>
    %c0_13 = arith.constant 0 : index
    %c0_14 = arith.constant 0 : index
    %17 = vector.load %arg7[%c0_13, %c0_14] : memref<1x128xf32, #tpu.memory_space<vmem>>, vector<1x128xf32>
    %18 = vector.broadcast %17 : vector<1x128xf32> to vector<32x128xf32>
    %19 = arith.addf %16, %18 : vector<32x128xf32>
    %c0_15 = arith.constant 0 : index
    %c0_16 = arith.constant 0 : index
    %20 = vector.load %arg8[%c0_15, %c0_16] : memref<32x128xf32, #tpu.memory_space<vmem>>, vector<32x128xf32>
    tpu.vector_store %arg8[%c0_15, %c0_16], %19 {strides = array<i32>} : memref<32x128xf32, #tpu.memory_space<vmem>>, vector<32x128xf32>,
    return
  }
  func.func @transform_0(%arg0: i32) -> (i32, i32) {
    %c0_i32 = arith.constant 0 : i32
    %c0_i32_0 = arith.constant 0 : i32
    return %arg0, %c0_i32 : i32, i32
  }
  func.func @transform_1(%arg0: i32) -> (i32, i32) {
    %c0_i32 = arith.constant 0 : i32
    %c0_i32_0 = arith.constant 0 : i32
    %c0_i32_1 = arith.constant 0 : i32
    return %c0_i32, %c0_i32_0 : i32, i32
  }
  func.func @transform_2(%arg0: i32) -> (i32, i32) {
    %c0_i32 = arith.constant 0 : i32
    %c0_i32_0 = arith.constant 0 : i32
    %c0_i32_1 = arith.constant 0 : i32
    return %c0_i32, %c0_i32_0 : i32, i32
  }
  func.func @transform_3(%arg0: i32) -> (i32, i32) {
    %c0_i32 = arith.constant 0 : i32
    %c0_i32_0 = arith.constant 0 : i32
    %c0_i32_1 = arith.constant 0 : i32
    return %c0_i32, %c0_i32_0 : i32, i32
  }
  func.func @transform_4(%arg0: i32) -> (i32, i32) {
    %c0_i32 = arith.constant 0 : i32
    %c0_i32_0 = arith.constant 0 : i32
    %c0_i32_1 = arith.constant 0 : i32
    return %c0_i32, %c0_i32_0 : i32, i32
  }
  func.func @transform_5(%arg0: i32) -> (i32, i32) {
    %c0_i32 = arith.constant 0 : i32
    %c0_i32_0 = arith.constant 0 : i32
    %c0_i32_1 = arith.constant 0 : i32
    return %c0_i32, %c0_i32_0 : i32, i32
  }
  func.func @transform_6(%arg0: i32) -> (i32, i32) {
    %c0_i32 = arith.constant 0 : i32
    %c0_i32_0 = arith.constant 0 : i32
    %c0_i32_1 = arith.constant 0 : i32
    return %c0_i32, %c0_i32_0 : i32, i32
  }
  func.func @transform_7(%arg0: i32) -> (i32, i32) {
    %c0_i32 = arith.constant 0 : i32
    %c0_i32_0 = arith.constant 0 : i32
    return %arg0, %c0_i32 : i32, i32
  }
}

</mosaic_0001>

<llo_original>
// kernel: tpu_custom_call.1
$region0: #{tpu_custom_call.1}
  #allocation0 [shape = 'u32[]', space=smem, size = 0x4, offset = 0x4, fixed_abs, tag = 'smem constant byte address 0x4 - core index']
  #allocation1 [shape = 'u32[144,128]{1,0:T(1,128)}', space=vmem, size = 0x12000, scoped, tag = 'internal scratch']
  %s0 = inlined_call_operand.hbm [shape: bf16[32,64], index: 0, kind: input, shape index: {}]
  %s1 = inlined_call_operand.hbm [shape: bf16[64,128], index: 1, kind: input, shape index: {}]
  %s2 = inlined_call_operand.vmem [shape: f32[1,128], index: 2, kind: input, shape index: {}]
  %s3 = inlined_call_operand.hbm [shape: bf16[128,128], index: 3, kind: input, shape index: {}]
  %s4 = inlined_call_operand.vmem [shape: f32[1,128], index: 4, kind: input, shape index: {}]
  %s5 = inlined_call_operand.hbm [shape: bf16[128,128], index: 5, kind: input, shape index: {}]
  %s6 = inlined_call_operand.vmem [shape: f32[1,128], index: 6, kind: input, shape index: {}]
  %s7 = inlined_call_operand.hbm [shape: f32[32,128], index: 7, kind: output, shape index: {}]
  %s8 = sld [smem:[#allocation0]]
  $region54: #{tpu_custom_call.1} parent=0
    _
  %s10 = ssub.s32 1, %s8
  %s11 = scalar_select 0, %s10, %s8
  $region1: #{tpu_custom_call.1} parent=0
    #allocation2 [shape = 'u8[8192]{0}', space=vmem, size = 0x2000, scoped, tag = 'input window, operand 0, single buffered']
    #allocation3 [shape = 's32[1]{0}', space=sflag, size = 0x4, scoped, tag = 'scoped memory for tpu_custom_call.1']
    #allocation4 [shape = 's32[1]{0}', space=sflag, size = 0x4, scoped, tag = 'scoped memory for tpu_custom_call.1']
    #allocation5 [shape = 'u8[16384]{0}', space=vmem, size = 0x4000, scoped, tag = 'input window, operand 1, single buffered']
    #allocation6 [shape = 's32[1]{0}', space=sflag, size = 0x4, scoped, tag = 'scoped memory for tpu_custom_call.1']
    #allocation7 [shape = 'u8[32768]{0}', space=vmem, size = 0x8000, scoped, tag = 'input window, operand 3, single buffered']
    #allocation8 [shape = 'u8[32768]{0}', space=vmem, size = 0x8000, scoped, tag = 'input window, operand 5, single buffered']
    #allocation9 [shape = 's32[1]{0}', space=sflag, size = 0x4, scoped, tag = 'scoped memory for tpu_custom_call.1']
    #allocation10 [shape = 'u8[16384]{0}', space=vmem, size = 0x4000, scoped, tag = 'output window, operand 0, single buffered']
    %12 = vsyncpa [#allocation3], 0
    %13 = vsyncpa [#allocation6], 0
    %14 = vsyncpa [#allocation9], 0
    %15 = vsyncpa [#allocation4], 0
    // Predicated region
    $region2: #{tpu_custom_call.1} parent=1 // pred_check
      _
    $region3: #{tpu_custom_call.1} parent=1 // pred_check_branch
      %17 = sbr.rel (0) target = $region5
    $region4: #{tpu_custom_call.1} parent=1 // pred_region
      %s19 = ssub.s32 256, 256
      %20 = vsyncadd [#allocation3], %s19
      %s21 = sshll.u32 [#allocation2], 4
      %s22 = int_to_ptr.vmem [resolvable:$true] %s21
      %27 = dma.hbm_to_vmem [thread:$0]  %s0, 256, %s22, [#allocation3], 64, 64, 4
    $region5: #{tpu_custom_call.1} parent=1 // pred_fallthru
      _
    // Predicated region
    $region6: #{tpu_custom_call.1} parent=1 // pred_check
      _
    $region7: #{tpu_custom_call.1} parent=1 // pred_check_branch
      %29 = sbr.rel (0) target = $region9
    $region8: #{tpu_custom_call.1} parent=1 // pred_region
      %s31 = ssub.s32 512, 512
      %32 = vsyncadd [#allocation6], %s31
      %s33 = sshll.u32 [#allocation5], 4
      %s34 = int_to_ptr.vmem [resolvable:$true] %s33
      %39 = dma.hbm_to_vmem [thread:$0]  %s1, 512, %s34, [#allocation6], 64, 64, 4
    $region9: #{tpu_custom_call.1} parent=1 // pred_fallthru
      _
    // Predicated region
    $region10: #{tpu_custom_call.1} parent=1 // pred_check
      _
    $region11: #{tpu_custom_call.1} parent=1 // pred_check_branch
      %41 = sbr.rel (0) target = $region13
    $region12: #{tpu_custom_call.1} parent=1 // pred_region
      _
    $region13: #{tpu_custom_call.1} parent=1 // pred_fallthru
      _
    // Predicated region
    $region14: #{tpu_custom_call.1} parent=1 // pred_check
      _
    $region15: #{tpu_custom_call.1} parent=1 // pred_check_branch
      %43 = sbr.rel (0) target = $region17
    $region16: #{tpu_custom_call.1} parent=1 // pred_region
      %s45 = ssub.s32 1024, 1024
      %46 = vsyncadd [#allocation6], %s45
      %s47 = sshll.u32 [#allocation7], 4
      %s48 = int_to_ptr.vmem [resolvable:$true] %s47
      %53 = dma.hbm_to_vmem [thread:$0]  %s3, 1024, %s48, [#allocation6], 64, 64, 4
    $region17: #{tpu_custom_call.1} parent=1 // pred_fallthru
      _
    // Predicated region
    $region18: #{tpu_custom_call.1} parent=1 // pred_check
      _
    $region19: #{tpu_custom_call.1} parent=1 // pred_check_branch
      %55 = sbr.rel (0) target = $region21
    $region20: #{tpu_custom_call.1} parent=1 // pred_region
      _
    $region21: #{tpu_custom_call.1} parent=1 // pred_fallthru
      _
    // Predicated region
    $region22: #{tpu_custom_call.1} parent=1 // pred_check
      _
    $region23: #{tpu_custom_call.1} parent=1 // pred_check_branch
      %57 = sbr.rel (0) target = $region25
    $region24: #{tpu_custom_call.1} parent=1 // pred_region
      %s59 = ssub.s32 1024, 1024
      %60 = vsyncadd [#allocation9], %s59
      %s61 = sshll.u32 [#allocation8], 4
      %s62 = int_to_ptr.vmem [resolvable:$true] %s61
      %67 = dma.hbm_to_vmem [thread:$0]  %s5, 1024, %s62, [#allocation9], 64, 64, 4
    $region25: #{tpu_custom_call.1} parent=1 // pred_fallthru
      _
    // Predicated region
    $region26: #{tpu_custom_call.1} parent=1 // pred_check
      _
    $region27: #{tpu_custom_call.1} parent=1 // pred_check_branch
      %69 = sbr.rel (0) target = $region29
    $region28: #{tpu_custom_call.1} parent=1 // pred_region
      _
    $region29: #{tpu_custom_call.1} parent=1 // pred_fallthru
      _
    // Predicated region
    $region30: #{tpu_custom_call.1} parent=1 // pred_check
      _
    $region31: #{tpu_custom_call.1} parent=1 // pred_check_branch
      %71 = sbr.rel (0) target = $region33
    $region32: #{tpu_custom_call.1} parent=1 // pred_region
      %72 = dma.done [#allocation3], 256
    $region33: #{tpu_custom_call.1} parent=1 // pred_fallthru
      _
    // Predicated region
    $region34: #{tpu_custom_call.1} parent=1 // pred_check
      _
    $region35: #{tpu_custom_call.1} parent=1 // pred_check_branch
      %74 = sbr.rel (0) target = $region37
    $region36: #{tpu_custom_call.1} parent=1 // pred_region
      %75 = dma.done [#allocation6], 512
    $region37: #{tpu_custom_call.1} parent=1 // pred_fallthru
      _
    // Predicated region
    $region38: #{tpu_custom_call.1} parent=1 // pred_check
      _
    $region39: #{tpu_custom_call.1} parent=1 // pred_check_branch
      %77 = sbr.rel (0) target = $region41
    $region40: #{tpu_custom_call.1} parent=1 // pred_region
      %78 = dma.done [#allocation6], 1024
    $region41: #{tpu_custom_call.1} parent=1 // pred_fallthru
      _
    // Predicated region
    $region42: #{tpu_custom_call.1} parent=1 // pred_check
      _
    $region43: #{tpu_custom_call.1} parent=1 // pred_check_branch
      %80 = sbr.rel (0) target = $region45
    $region44: #{tpu_custom_call.1} parent=1 // pred_region
      %81 = dma.done [#allocation9], 1024
    $region45: #{tpu_custom_call.1} parent=1 // pred_fallthru
      _
    %v83 = vld [vmem:[#allocation2] sm:$0xf]
    %v84 = vld [vmem:[#allocation2 + $0x4] sm:$0xf]
    %v85 = vld [vmem:[#allocation2 + $0x8] sm:$0xf]
    %v86 = vld [vmem:[#allocation2 + $0xc] sm:$0xf]
    %v87 = vld [vmem:[#allocation5] sm:$0xf]
    %v88 = vld [vmem:[#allocation5 + $0x4] sm:$0xf]
    %v89 = vld [vmem:[#allocation5 + $0x8] sm:$0xf]
    %v90 = vld [vmem:[#allocation5 + $0xc] sm:$0xf]
    %v91 = vld [vmem:[#allocation5 + $0x10] sm:$0xf]
    %v92 = vld [vmem:[#allocation5 + $0x14] sm:$0xf]
    %v93 = vld [vmem:[#allocation5 + $0x18] sm:$0xf]
    %v94 = vld [vmem:[#allocation5 + $0x1c] sm:$0xf]
    %v95 = vld [vmem:[%s2] sm:$0x1]
    %v97 = vlaneseq
    %v98 = vshrl.u32 %v97, 7
    %v99 = vsub.s32 0, %v98
    %v100 = vrot.slane %v95, %v99
    %v106 = vunpack.c.l.b16 %v83
    %v107 = vunpack.c.l.b16 %v84
    %v108 = vunpack.c.l.b16 %v85
    %v109 = vunpack.c.l.b16 %v86
    %v110 = vpack.c.b16 %v107, %v106
    %v111 = vpack.c.b16 %v109, %v108
    %v120 = vunpack.c.l.b16 %v87
    %v121 = vunpack.c.l.b16 %v88
    %v122 = vunpack.c.l.b16 %v89
    %v123 = vunpack.c.l.b16 %v90
    %v124 = vunpack.c.l.b16 %v91
    %v125 = vunpack.c.l.b16 %v92
    %v126 = vunpack.c.l.b16 %v93
    %v127 = vunpack.c.l.b16 %v94
    %v128 = vpack.c.b16 %v121, %v120
    %v129 = vpack.c.b16 %v123, %v122
    %v130 = vpack.c.b16 %v125, %v124
    %v131 = vpack.c.b16 %v127, %v126
    %vm136 = vcmask 523264
    %v138 = vsel %vm136, %v110, 0
    %v141 = vsel %vm136, %v111, 0
    %143 = vmatprep.subr.bf16.mxu0 0
    %144 = vmatpush1.bf16.msra.mxu0 %v128
    %145 = vmatprep.subr.bf16.mxu0 0
    %146 = vmatpush1.bf16.msra.mxu0 %v129
    %147 = vmatprep.subr.bf16.mxu0 0
    %148 = vmatpush1.bf16.msra.mxu0 %v130
    %149 = vmatprep.subr.bf16.mxu0 0
    %150 = vmatpush1.bf16.msra.mxu0 %v131
    %151 = vmatprep.subr.bf16.mxu0 0
    %152 = vmatpush1.bf16.msra.mxu0 0
    %153 = vmatprep.subr.bf16.mxu0 0
    %154 = vmatpush1.bf16.msra.mxu0 0
    %155 = vmatprep.subr.bf16.mxu0 0
    %156 = vmatpush1.bf16.msra.mxu0 0
    %157 = vmatprep.subr.bf16.mxu0 0
    %158 = vmatpush1.bf16.msra.mxu0 0
    %159 = vmatprep.subr.bf16.mxu0 0
    %160 = vmatpush1.bf16.msra.mxu0 0
    %161 = vmatprep.subr.bf16.mxu0 0
    %162 = vmatpush1.bf16.msra.mxu0 0
    %163 = vmatprep.subr.bf16.mxu0 0
    %164 = vmatpush1.bf16.msra.mxu0 0
    %165 = vmatprep.subr.bf16.mxu0 0
    %166 = vmatpush1.bf16.msra.mxu0 0
    %167 = vmatprep.subr.bf16.mxu0 0
    %168 = vmatpush1.bf16.msra.mxu0 0
    %169 = vmatprep.subr.bf16.mxu0 0
    %170 = vmatpush1.bf16.msra.mxu0 0
    %171 = vmatprep.subr.bf16.mxu0 0
    %172 = vmatpush1.bf16.msra.mxu0 0
    %173 = vmatprep.subr.bf16.mxu0 0
    %174 = vmatpush1.bf16.msra.mxu0 0
    %175 = vmatprep.mubr.bf16.mxu0 0
    %176 = vmatmul.mubr.bf16.gmra.mrb[0].mxu0 %v138
    %v177 = vpop.f32.mrb[0].mxu0
    %v178 = vadd.f32 %v100, %v177
    %v179 = vpop.f32.mrb[0].mxu0
    %v180 = vpop.f32.mrb[0].mxu0
    %v181 = vadd.f32 %v100, %v180
    %v182 = vpop.f32.mrb[0].mxu0
    %183 = vmatprep.mubr.bf16.mxu0 0
    %184 = vmatmul.mubr.bf16.gmra.mrb[0].mxu0 %v141
    %v185 = vpop.f32.mrb[0].mxu0
    %v186 = vadd.f32 %v100, %v185
    %v187 = vpop.f32.mrb[0].mxu0
    %v188 = vpop.f32.mrb[0].mxu0
    %v189 = vadd.f32 %v100, %v188
    %v190 = vpop.f32.mrb[0].mxu0
    %191 = vdwg.mxu0
    %v192 = vtanh.pop %v178
    %v193 = vtanh.pop %v181
    %v194 = vtanh.pop %v186
    %v195 = vtanh.pop %v189
    %v196 = vpack.c.bf16 %v193, %v192
    %v197 = vpack.c.bf16 %v195, %v194
    %v198 = vld [vmem:[#allocation7] sm:$0xf]
    %v199 = vld [vmem:[#allocation7 + $0x4] sm:$0xf]
    %v200 = vld [vmem:[#allocation7 + $0x8] sm:$0xf]
    %v201 = vld [vmem:[#allocation7 + $0xc] sm:$0xf]
    %v202 = vld [vmem:[#allocation7 + $0x10] sm:$0xf]
    %v203 = vld [vmem:[#allocation7 + $0x14] sm:$0xf]
    %v204 = vld [vmem:[#allocation7 + $0x18] sm:$0xf]
    %v205 = vld [vmem:[#allocation7 + $0x1c] sm:$0xf]
    %v206 = vld [vmem:[#allocation7 + $0x20] sm:$0xf]
    %v207 = vld [vmem:[#allocation7 + $0x24] sm:$0xf]
    %v208 = vld [vmem:[#allocation7 + $0x28] sm:$0xf]
    %v209 = vld [vmem:[#allocation7 + $0x2c] sm:$0xf]
    %v210 = vld [vmem:[#allocation7 + $0x30] sm:$0xf]
    %v211 = vld [vmem:[#allocation7 + $0x34] sm:$0xf]
    %v212 = vld [vmem:[#allocation7 + $0x38] sm:$0xf]
    %v213 = vld [vmem:[#allocation7 + $0x3c] sm:$0xf]
    %v214 = vld [vmem:[%s4] sm:$0x1]
    %v216 = vlaneseq
    %v217 = vshrl.u32 %v216, 7
    %v218 = vsub.s32 0, %v217
    %v219 = vrot.slane %v214, %v218
    %v237 = vunpack.c.l.b16 %v198
    %v238 = vunpack.c.l.b16 %v199
    %v239 = vunpack.c.l.b16 %v200
    %v240 = vunpack.c.l.b16 %v201
    %v241 = vunpack.c.l.b16 %v202
    %v242 = vunpack.c.l.b16 %v203
    %v243 = vunpack.c.l.b16 %v204
    %v244 = vunpack.c.l.b16 %v205
    %v245 = vunpack.c.l.b16 %v206
    %v246 = vunpack.c.l.b16 %v207
    %v247 = vunpack.c.l.b16 %v208
    %v248 = vunpack.c.l.b16 %v209
    %v249 = vunpack.c.l.b16 %v210
    %v250 = vunpack.c.l.b16 %v211
    %v251 = vunpack.c.l.b16 %v212
    %v252 = vunpack.c.l.b16 %v213
    %v253 = vpack.c.b16 %v238, %v237
    %v254 = vpack.c.b16 %v240, %v239
    %v255 = vpack.c.b16 %v242, %v241
    %v256 = vpack.c.b16 %v244, %v243
    %v257 = vpack.c.b16 %v246, %v245
    %v258 = vpack.c.b16 %v248, %v247
    %v259 = vpack.c.b16 %v250, %v249
    %v260 = vpack.c.b16 %v252, %v251
    %269 = vmatprep.subr.bf16.mxu0 0
    %270 = vmatpush1.bf16.msra.mxu0 %v253
    %271 = vmatprep.subr.bf16.mxu0 0
    %272 = vmatpush1.bf16.msra.mxu0 %v254
    %273 = vmatprep.subr.bf16.mxu0 0
    %274 = vmatpush1.bf16.msra.mxu0 %v255
    %275 = vmatprep.subr.bf16.mxu0 0
    %276 = vmatpush1.bf16.msra.mxu0 %v256
    %277 = vmatprep.subr.bf16.mxu0 0
    %278 = vmatpush1.bf16.msra.mxu0 %v257
    %279 = vmatprep.subr.bf16.mxu0 0
    %280 = vmatpush1.bf16.msra.mxu0 %v258
    %281 = vmatprep.subr.bf16.mxu0 0
    %282 = vmatpush1.bf16.msra.mxu0 %v259
    %283 = vmatprep.subr.bf16.mxu0 0
    %284 = vmatpush1.bf16.msra.mxu0 %v260
    %285 = vmatprep.subr.bf16.mxu0 0
    %286 = vmatpush1.bf16.msra.mxu0 0
    %287 = vmatprep.subr.bf16.mxu0 0
    %288 = vmatpush1.bf16.msra.mxu0 0
    %289 = vmatprep.subr.bf16.mxu0 0
    %290 = vmatpush1.bf16.msra.mxu0 0
    %291 = vmatprep.subr.bf16.mxu0 0
    %292 = vmatpush1.bf16.msra.mxu0 0
    %293 = vmatprep.subr.bf16.mxu0 0
    %294 = vmatpush1.bf16.msra.mxu0 0
    %295 = vmatprep.subr.bf16.mxu0 0
    %296 = vmatpush1.bf16.msra.mxu0 0
    %297 = vmatprep.subr.bf16.mxu0 0
    %298 = vmatpush1.bf16.msra.mxu0 0
    %299 = vmatprep.subr.bf16.mxu0 0
    %300 = vmatpush1.bf16.msra.mxu0 0
    %301 = vmatprep.mubr.bf16.mxu0 0
    %302 = vmatmul.mubr.bf16.gmra.mrb[0].mxu0 %v196
    %v303 = vpop.f32.mrb[0].mxu0
    %v304 = vadd.f32 %v219, %v303
    %v305 = vpop.f32.mrb[0].mxu0
    %v306 = vpop.f32.mrb[0].mxu0
    %v307 = vadd.f32 %v219, %v306
    %v308 = vpop.f32.mrb[0].mxu0
    %309 = vmatprep.mubr.bf16.mxu0 0
    %310 = vmatmul.mubr.bf16.gmra.mrb[0].mxu0 %v197
    %v311 = vpop.f32.mrb[0].mxu0
    %v312 = vadd.f32 %v219, %v311
    %v313 = vpop.f32.mrb[0].mxu0
    %v314 = vpop.f32.mrb[0].mxu0
    %v315 = vadd.f32 %v219, %v314
    %v316 = vpop.f32.mrb[0].mxu0
    %317 = vdwg.mxu0
    %v318 = vtanh.pop %v304
    %v319 = vtanh.pop %v307
    %v320 = vtanh.pop %v312
    %v321 = vtanh.pop %v315
    %v322 = vpack.c.bf16 %v319, %v318
    %v323 = vpack.c.bf16 %v321, %v320
    %v324 = vld [vmem:[#allocation8] sm:$0xf]
    %v325 = vld [vmem:[#allocation8 + $0x4] sm:$0xf]
    %v326 = vld [vmem:[#allocation8 + $0x8] sm:$0xf]
    %v327 = vld [vmem:[#allocation8 + $0xc] sm:$0xf]
    %v328 = vld [vmem:[#allocation8 + $0x10] sm:$0xf]
    %v329 = vld [vmem:[#allocation8 + $0x14] sm:$0xf]
    %v330 = vld [vmem:[#allocation8 + $0x18] sm:$0xf]
    %v331 = vld [vmem:[#allocation8 + $0x1c] sm:$0xf]
    %v332 = vld [vmem:[#allocation8 + $0x20] sm:$0xf]
    %v333 = vld [vmem:[#allocation8 + $0x24] sm:$0xf]
    %v334 = vld [vmem:[#allocation8 + $0x28] sm:$0xf]
    %v335 = vld [vmem:[#allocation8 + $0x2c] sm:$0xf]
    %v336 = vld [vmem:[#allocation8 + $0x30] sm:$0xf]
    %v337 = vld [vmem:[#allocation8 + $0x34] sm:$0xf]
    %v338 = vld [vmem:[#allocation8 + $0x38] sm:$0xf]
    %v339 = vld [vmem:[#allocation8 + $0x3c] sm:$0xf]
    %v340 = vld [vmem:[%s6] sm:$0x1]
    %v342 = vlaneseq
    %v343 = vshrl.u32 %v342, 7
    %v344 = vsub.s32 0, %v343
    %v345 = vrot.slane %v340, %v344
    %v363 = vunpack.c.l.b16 %v324
    %v364 = vunpack.c.l.b16 %v325
    %v365 = vunpack.c.l.b16 %v326
    %v366 = vunpack.c.l.b16 %v327
    %v367 = vunpack.c.l.b16 %v328
    %v368 = vunpack.c.l.b16 %v329
    %v369 = vunpack.c.l.b16 %v330
    %v370 = vunpack.c.l.b16 %v331
    %v371 = vunpack.c.l.b16 %v332
    %v372 = vunpack.c.l.b16 %v333
    %v373 = vunpack.c.l.b16 %v334
    %v374 = vunpack.c.l.b16 %v335
    %v375 = vunpack.c.l.b16 %v336
    %v376 = vunpack.c.l.b16 %v337
    %v377 = vunpack.c.l.b16 %v338
    %v378 = vunpack.c.l.b16 %v339
    %v379 = vpack.c.b16 %v364, %v363
    %v380 = vpack.c.b16 %v366, %v365
    %v381 = vpack.c.b16 %v368, %v367
    %v382 = vpack.c.b16 %v370, %v369
    %v383 = vpack.c.b16 %v372, %v371
    %v384 = vpack.c.b16 %v374, %v373
    %v385 = vpack.c.b16 %v376, %v375
    %v386 = vpack.c.b16 %v378, %v377
    %395 = vmatprep.subr.bf16.mxu0 0
    %396 = vmatpush1.bf16.msra.mxu0 %v379
    %397 = vmatprep.subr.bf16.mxu0 0
    %398 = vmatpush1.bf16.msra.mxu0 %v380
    %399 = vmatprep.subr.bf16.mxu0 0
    %400 = vmatpush1.bf16.msra.mxu0 %v381
    %401 = vmatprep.subr.bf16.mxu0 0
    %402 = vmatpush1.bf16.msra.mxu0 %v382
    %403 = vmatprep.subr.bf16.mxu0 0
    %404 = vmatpush1.bf16.msra.mxu0 %v383
    %405 = vmatprep.subr.bf16.mxu0 0
    %406 = vmatpush1.bf16.msra.mxu0 %v384
    %407 = vmatprep.subr.bf16.mxu0 0
    %408 = vmatpush1.bf16.msra.mxu0 %v385
    %409 = vmatprep.subr.bf16.mxu0 0
    %410 = vmatpush1.bf16.msra.mxu0 %v386
    %411 = vmatprep.subr.bf16.mxu0 0
    %412 = vmatpush1.bf16.msra.mxu0 0
    %413 = vmatprep.subr.bf16.mxu0 0
    %414 = vmatpush1.bf16.msra.mxu0 0
    %415 = vmatprep.subr.bf16.mxu0 0
    %416 = vmatpush1.bf16.msra.mxu0 0
    %417 = vmatprep.subr.bf16.mxu0 0
    %418 = vmatpush1.bf16.msra.mxu0 0
    %419 = vmatprep.subr.bf16.mxu0 0
    %420 = vmatpush1.bf16.msra.mxu0 0
    %421 = vmatprep.subr.bf16.mxu0 0
    %422 = vmatpush1.bf16.msra.mxu0 0
    %423 = vmatprep.subr.bf16.mxu0 0
    %424 = vmatpush1.bf16.msra.mxu0 0
    %425 = vmatprep.subr.bf16.mxu0 0
    %426 = vmatpush1.bf16.msra.mxu0 0
    %427 = vmatprep.mubr.bf16.mxu0 0
    %428 = vmatmul.mubr.bf16.gmra.mrb[0].mxu0 %v322
    %v429 = vpop.f32.mrb[0].mxu0
    %v430 = vadd.f32 %v345, %v429
    %v431 = vpop.f32.mrb[0].mxu0
    %v432 = vpop.f32.mrb[0].mxu0
    %v433 = vadd.f32 %v345, %v432
    %v434 = vpop.f32.mrb[0].mxu0
    %435 = vmatprep.mubr.bf16.mxu0 0
    %436 = vmatmul.mubr.bf16.gmra.mrb[0].mxu0 %v323
    %v437 = vpop.f32.mrb[0].mxu0
    %v438 = vadd.f32 %v345, %v437
    %v439 = vpop.f32.mrb[0].mxu0
    %v440 = vpop.f32.mrb[0].mxu0
    %v441 = vadd.f32 %v345, %v440
    %v442 = vpop.f32.mrb[0].mxu0
    %443 = vdwg.mxu0
    %444 = vst [vmem:[#allocation10] sm:$0xff] %v430
    %445 = vst [vmem:[#allocation10 + $0x8] sm:$0xff] %v433
    %446 = vst [vmem:[#allocation10 + $0x10] sm:$0xff] %v438
    %447 = vst [vmem:[#allocation10 + $0x18] sm:$0xff] %v441
    // Predicated region
    $region46: #{tpu_custom_call.1} parent=1 // pred_check
      _
    $region47: #{tpu_custom_call.1} parent=1 // pred_check_branch
      %449 = sbr.rel (0) target = $region49
    $region48: #{tpu_custom_call.1} parent=1 // pred_region
      %s451 = ssub.s32 512, 512
      %452 = vsyncadd [#allocation4], %s451
      %s453 = sshll.u32 [#allocation10], 4
      %s454 = int_to_ptr.vmem [resolvable:$true] %s453
      %459 = dma.vmem_to_hbm [thread:$0]  %s454, 512, %s7, [#allocation4], 128, 128, 8
    $region49: #{tpu_custom_call.1} parent=1 // pred_fallthru
      _
    // Predicated region
    $region50: #{tpu_custom_call.1} parent=1 // pred_check
      _
    $region51: #{tpu_custom_call.1} parent=1 // pred_check_branch
      %461 = sbr.rel (0) target = $region53
    $region52: #{tpu_custom_call.1} parent=1 // pred_region
      %462 = dma.done [#allocation4], 512
    $region53: #{tpu_custom_call.1} parent=1 // pred_fallthru
      _
    %463 = vsyncpa [#allocation3], 1
    %464 = vsyncpa [#allocation6], 1
    %465 = vsyncpa [#allocation9], 1
    %466 = vsyncpa [#allocation4], 1

// kernel: tpu_custom_call.1
$region0: #{tpu_custom_call.1}
  #allocation0 [shape = 'u32[]', space=smem, size = 0x4, offset = 0x4, fixed_abs, tag = 'smem constant byte address 0x4 - core index']
  #allocation1 [shape = 'u32[144,128]{1,0:T(1,128)}', space=vmem, size = 0x12000, scoped, tag = 'internal scratch']
  %s0 = inlined_call_operand.hbm [shape: bf16[32,64], index: 0, kind: input, shape index: {}]
  %s1 = inlined_call_operand.hbm [shape: bf16[64,128], index: 1, kind: input, shape index: {}]
  %s2 = inlined_call_operand.vmem [shape: f32[1,128], index: 2, kind: input, shape index: {}]
  %s3 = inlined_call_operand.hbm [shape: bf16[128,128], index: 3, kind: input, shape index: {}]
  %s4 = inlined_call_operand.vmem [shape: f32[1,128], index: 4, kind: input, shape index: {}]
  %s5 = inlined_call_operand.hbm [shape: bf16[128,128], index: 5, kind: input, shape index: {}]
  %s6 = inlined_call_operand.vmem [shape: f32[1,128], index: 6, kind: input, shape index: {}]
  %s7 = inlined_call_operand.hbm [shape: f32[32,128], index: 7, kind: output, shape index: {}]
  %s8 = sld [smem:[#allocation0]]
  $region54: #{tpu_custom_call.1} parent=0
    _
  %s10 = ssub.s32 1, %s8
  %s11 = scalar_select 0, %s10, %s8
  $region1: #{tpu_custom_call.1} parent=0
    #allocation2 [shape = 'u8[8192]{0}', space=vmem, size = 0x2000, scoped, tag = 'input window, operand 0, single buffered']
    #allocation3 [shape = 's32[1]{0}', space=sflag, size = 0x4, scoped, tag = 'scoped memory for tpu_custom_call.1']
    #allocation4 [shape = 's32[1]{0}', space=sflag, size = 0x4, scoped, tag = 'scoped memory for tpu_custom_call.1']
    #allocation5 [shape = 'u8[16384]{0}', space=vmem, size = 0x4000, scoped, tag = 'input window, operand 1, single buffered']
    #allocation6 [shape = 's32[1]{0}', space=sflag, size = 0x4, scoped, tag = 'scoped memory for tpu_custom_call.1']
    #allocation7 [shape = 'u8[32768]{0}', space=vmem, size = 0x8000, scoped, tag = 'input window, operand 3, single buffered']
    #allocation8 [shape = 'u8[32768]{0}', space=vmem, size = 0x8000, scoped, tag = 'input window, operand 5, single buffered']
    #allocation9 [shape = 's32[1]{0}', space=sflag, size = 0x4, scoped, tag = 'scoped memory for tpu_custom_call.1']
    #allocation10 [shape = 'u8[16384]{0}', space=vmem, size = 0x4000, scoped, tag = 'output window, operand 0, single buffered']
    %12 = vsyncpa [#allocation3], 0
    %13 = vsyncpa [#allocation6], 0
    %14 = vsyncpa [#allocation9], 0
    %15 = vsyncpa [#allocation4], 0
    // Predicated region
    $region2: #{tpu_custom_call.1} parent=1 // pred_check
      _
    $region3: #{tpu_custom_call.1} parent=1 // pred_check_branch
      %17 = sbr.rel (0) target = $region5
    $region4: #{tpu_custom_call.1} parent=1 // pred_region
      %s19 = ssub.s32 256, 256
      %20 = vsyncadd [#allocation3], %s19
      %s21 = sshll.u32 [#allocation2], 4
      %s22 = int_to_ptr.vmem [resolvable:$true] %s21
      %27 = dma.hbm_to_vmem [thread:$0]  %s0, 256, %s22, [#allocation3], 64, 64, 4
    $region5: #{tpu_custom_call.1} parent=1 // pred_fallthru
      _
    // Predicated region
    $region6: #{tpu_custom_call.1} parent=1 // pred_check
      _
    $region7: #{tpu_custom_call.1} parent=1 // pred_check_branch
      %29 = sbr.rel (0) target = $region9
    $region8: #{tpu_custom_call.1} parent=1 // pred_region
      %s31 = ssub.s32 512, 512
      %32 = vsyncadd [#allocation6], %s31
      %s33 = sshll.u32 [#allocation5], 4
      %s34 = int_to_ptr.vmem [resolvable:$true] %s33
      %39 = dma.hbm_to_vmem [thread:$0]  %s1, 512, %s34, [#allocation6], 64, 64, 4
    $region9: #{tpu_custom_call.1} parent=1 // pred_fallthru
      _
    // Predicated region
    $region10: #{tpu_custom_call.1} parent=1 // pred_check
      _
    $region11: #{tpu_custom_call.1} parent=1 // pred_check_branch
      %41 = sbr.rel (0) target = $region13
    $region12: #{tpu_custom_call.1} parent=1 // pred_region
      _
    $region13: #{tpu_custom_call.1} parent=1 // pred_fallthru
      _
    // Predicated region
    $region14: #{tpu_custom_call.1} parent=1 // pred_check
      _
    $region15: #{tpu_custom_call.1} parent=1 // pred_check_branch
      %43 = sbr.rel (0) target = $region17
    $region16: #{tpu_custom_call.1} parent=1 // pred_region
      %s45 = ssub.s32 1024, 1024
      %46 = vsyncadd [#allocation6], %s45
      %s47 = sshll.u32 [#allocation7], 4
      %s48 = int_to_ptr.vmem [resolvable:$true] %s47
      %53 = dma.hbm_to_vmem [thread:$0]  %s3, 1024, %s48, [#allocation6], 64, 64, 4
    $region17: #{tpu_custom_call.1} parent=1 // pred_fallthru
      _
    // Predicated region
    $region18: #{tpu_custom_call.1} parent=1 // pred_check
      _
    $region19: #{tpu_custom_call.1} parent=1 // pred_check_branch
      %55 = sbr.rel (0) target = $region21
    $region20: #{tpu_custom_call.1} parent=1 // pred_region
      _
    $region21: #{tpu_custom_call.1} parent=1 // pred_fallthru
      _
    // Predicated region
    $region22: #{tpu_custom_call.1} parent=1 // pred_check
      _
    $region23: #{tpu_custom_call.1} parent=1 // pred_check_branch
      %57 = sbr.rel (0) target = $region25
    $region24: #{tpu_custom_call.1} parent=1 // pred_region
      %s59 = ssub.s32 1024, 1024
      %60 = vsyncadd [#allocation9], %s59
      %s61 = sshll.u32 [#allocation8], 4
      %s62 = int_to_ptr.vmem [resolvable:$true] %s61
      %67 = dma.hbm_to_vmem [thread:$0]  %s5, 1024, %s62, [#allocation9], 64, 64, 4
    $region25: #{tpu_custom_call.1} parent=1 // pred_fallthru
      _
    // Predicated region
    $region26: #{tpu_custom_call.1} parent=1 // pred_check
      _
    $region27: #{tpu_custom_call.1} parent=1 // pred_check_branch
      %69 = sbr.rel (0) target = $region29
    $region28: #{tpu_custom_call.1} parent=1 // pred_region
      _
    $region29: #{tpu_custom_call.1} parent=1 // pred_fallthru
      _
    // Predicated region
    $region30: #{tpu_custom_call.1} parent=1 // pred_check
      _
    $region31: #{tpu_custom_call.1} parent=1 // pred_check_branch
      %71 = sbr.rel (0) target = $region33
    $region32: #{tpu_custom_call.1} parent=1 // pred_region
      %72 = dma.done [#allocation3], 256
    $region33: #{tpu_custom_call.1} parent=1 // pred_fallthru
      _
    // Predicated region
    $region34: #{tpu_custom_call.1} parent=1 // pred_check
      _
    $region35: #{tpu_custom_call.1} parent=1 // pred_check_branch
      %74 = sbr.rel (0) target = $region37
    $region36: #{tpu_custom_call.1} parent=1 // pred_region
      %75 = dma.done [#allocation6], 512
    $region37: #{tpu_custom_call.1} parent=1 // pred_fallthru
      _
    // Predicated region
    $region38: #{tpu_custom_call.1} parent=1 // pred_check
      _
    $region39: #{tpu_custom_call.1} parent=1 // pred_check_branch
      %77 = sbr.rel (0) target = $region41
    $region40: #{tpu_custom_call.1} parent=1 // pred_region
      %78 = dma.done [#allocation6], 1024
    $region41: #{tpu_custom_call.1} parent=1 // pred_fallthru
      _
    // Predicated region
    $region42: #{tpu_custom_call.1} parent=1 // pred_check
      _
    $region43: #{tpu_custom_call.1} parent=1 // pred_check_branch
      %80 = sbr.rel (0) target = $region45
    $region44: #{tpu_custom_call.1} parent=1 // pred_region
      %81 = dma.done [#allocation9], 1024
    $region45: #{tpu_custom_call.1} parent=1 // pred_fallthru
      _
    %v83 = vld [vmem:[#allocation2] sm:$0xf]
    %v84 = vld [vmem:[#allocation2 + $0x4] sm:$0xf]
    %v85 = vld [vmem:[#allocation2 + $0x8] sm:$0xf]
    %v86 = vld [vmem:[#allocation2 + $0xc] sm:$0xf]
    %v87 = vld [vmem:[#allocation5] sm:$0xf]
    %v88 = vld [vmem:[#allocation5 + $0x4] sm:$0xf]
    %v89 = vld [vmem:[#allocation5 + $0x8] sm:$0xf]
    %v90 = vld [vmem:[#allocation5 + $0xc] sm:$0xf]
    %v91 = vld [vmem:[#allocation5 + $0x10] sm:$0xf]
    %v92 = vld [vmem:[#allocation5 + $0x14] sm:$0xf]
    %v93 = vld [vmem:[#allocation5 + $0x18] sm:$0xf]
    %v94 = vld [vmem:[#allocation5 + $0x1c] sm:$0xf]
    %v95 = vld [vmem:[%s2] sm:$0x1]
    %v97 = vlaneseq
    %v98 = vshrl.u32 %v97, 7
    %v99 = vsub.s32 0, %v98
    %v100 = vrot.slane %v95, %v99
    %v106 = vunpack.c.l.b16 %v83
    %v107 = vunpack.c.l.b16 %v84
    %v108 = vunpack.c.l.b16 %v85
    %v109 = vunpack.c.l.b16 %v86
    %v110 = vpack.c.b16 %v107, %v106
    %v111 = vpack.c.b16 %v109, %v108
    %v120 = vunpack.c.l.b16 %v87
    %v121 = vunpack.c.l.b16 %v88
    %v122 = vunpack.c.l.b16 %v89
    %v123 = vunpack.c.l.b16 %v90
    %v124 = vunpack.c.l.b16 %v91
    %v125 = vunpack.c.l.b16 %v92
    %v126 = vunpack.c.l.b16 %v93
    %v127 = vunpack.c.l.b16 %v94
    %v128 = vpack.c.b16 %v121, %v120
    %v129 = vpack.c.b16 %v123, %v122
    %v130 = vpack.c.b16 %v125, %v124
    %v131 = vpack.c.b16 %v127, %v126
    %vm136 = vcmask 523264
    %v138 = vsel %vm136, %v110, 0
    %v141 = vsel %vm136, %v111, 0
    %143 = vmatprep.subr.bf16.mxu0 0
    %144 = vmatpush1.bf16.msra.mxu0 %v128
    %145 = vmatprep.subr.bf16.mxu0 0
    %146 = vmatpush1.bf16.msra.mxu0 %v129
    %147 = vmatprep.subr.bf16.mxu0 0
    %148 = vmatpush1.bf16.msra.mxu0 %v130
    %149 = vmatprep.subr.bf16.mxu0 0
    %150 = vmatpush1.bf16.msra.mxu0 %v131
    %151 = vmatprep.subr.bf16.mxu0 0
    %152 = vmatpush1.bf16.msra.mxu0 0
    %153 = vmatprep.subr.bf16.mxu0 0
    %154 = vmatpush1.bf16.msra.mxu0 0
    %155 = vmatprep.subr.bf16.mxu0 0
    %156 = vmatpush1.bf16.msra.mxu0 0
    %157 = vmatprep.subr.bf16.mxu0 0
    %158 = vmatpush1.bf16.msra.mxu0 0
    %159 = vmatprep.subr.bf16.mxu0 0
    %160 = vmatpush1.bf16.msra.mxu0 0
    %161 = vmatprep.subr.bf16.mxu0 0
    %162 = vmatpush1.bf16.msra.mxu0 0
    %163 = vmatprep.subr.bf16.mxu0 0
    %164 = vmatpush1.bf16.msra.mxu0 0
    %165 = vmatprep.subr.bf16.mxu0 0
    %166 = vmatpush1.bf16.msra.mxu0 0
    %167 = vmatprep.subr.bf16.mxu0 0
    %168 = vmatpush1.bf16.msra.mxu0 0
    %169 = vmatprep.subr.bf16.mxu0 0
    %170 = vmatpush1.bf16.msra.mxu0 0
    %171 = vmatprep.subr.bf16.mxu0 0
    %172 = vmatpush1.bf16.msra.mxu0 0
    %173 = vmatprep.subr.bf16.mxu0 0
    %174 = vmatpush1.bf16.msra.mxu0 0
    %175 = vmatprep.mubr.bf16.mxu0 0
    %176 = vmatmul.mubr.bf16.gmra.mrb[0].mxu0 %v138
    %v177 = vpop.f32.mrb[0].mxu0
    %v178 = vadd.f32 %v100, %v177
    %v179 = vpop.f32.mrb[0].mxu0
    %v180 = vpop.f32.mrb[0].mxu0
    %v181 = vadd.f32 %v100, %v180
    %v182 = vpop.f32.mrb[0].mxu0
    %183 = vmatprep.mubr.bf16.mxu0 0
    %184 = vmatmul.mubr.bf16.gmra.mrb[0].mxu0 %v141
    %v185 = vpop.f32.mrb[0].mxu0
    %v186 = vadd.f32 %v100, %v185
    %v187 = vpop.f32.mrb[0].mxu0
    %v188 = vpop.f32.mrb[0].mxu0
    %v189 = vadd.f32 %v100, %v188
    %v190 = vpop.f32.mrb[0].mxu0
    %191 = vdwg.mxu0
    %v192 = vtanh.pop %v178
    %v193 = vtanh.pop %v181
    %v194 = vtanh.pop %v186
    %v195 = vtanh.pop %v189
    %v196 = vpack.c.bf16 %v193, %v192
    %v197 = vpack.c.bf16 %v195, %v194
    %v198 = vld [vmem:[#allocation7] sm:$0xf]
    %v199 = vld [vmem:[#allocation7 + $0x4] sm:$0xf]
    %v200 = vld [vmem:[#allocation7 + $0x8] sm:$0xf]
    %v201 = vld [vmem:[#allocation7 + $0xc] sm:$0xf]
    %v202 = vld [vmem:[#allocation7 + $0x10] sm:$0xf]
    %v203 = vld [vmem:[#allocation7 + $0x14] sm:$0xf]
    %v204 = vld [vmem:[#allocation7 + $0x18] sm:$0xf]
    %v205 = vld [vmem:[#allocation7 + $0x1c] sm:$0xf]
    %v206 = vld [vmem:[#allocation7 + $0x20] sm:$0xf]
    %v207 = vld [vmem:[#allocation7 + $0x24] sm:$0xf]
    %v208 = vld [vmem:[#allocation7 + $0x28] sm:$0xf]
    %v209 = vld [vmem:[#allocation7 + $0x2c] sm:$0xf]
    %v210 = vld [vmem:[#allocation7 + $0x30] sm:$0xf]
    %v211 = vld [vmem:[#allocation7 + $0x34] sm:$0xf]
    %v212 = vld [vmem:[#allocation7 + $0x38] sm:$0xf]
    %v213 = vld [vmem:[#allocation7 + $0x3c] sm:$0xf]
    %v214 = vld [vmem:[%s4] sm:$0x1]
    %v216 = vlaneseq
    %v217 = vshrl.u32 %v216, 7
    %v218 = vsub.s32 0, %v217
    %v219 = vrot.slane %v214, %v218
    %v237 = vunpack.c.l.b16 %v198
    %v238 = vunpack.c.l.b16 %v199
    %v239 = vunpack.c.l.b16 %v200
    %v240 = vunpack.c.l.b16 %v201
    %v241 = vunpack.c.l.b16 %v202
    %v242 = vunpack.c.l.b16 %v203
    %v243 = vunpack.c.l.b16 %v204
    %v244 = vunpack.c.l.b16 %v205
    %v245 = vunpack.c.l.b16 %v206
    %v246 = vunpack.c.l.b16 %v207
    %v247 = vunpack.c.l.b16 %v208
    %v248 = vunpack.c.l.b16 %v209
    %v249 = vunpack.c.l.b16 %v210
    %v250 = vunpack.c.l.b16 %v211
    %v251 = vunpack.c.l.b16 %v212
    %v252 = vunpack.c.l.b16 %v213
    %v253 = vpack.c.b16 %v238, %v237
    %v254 = vpack.c.b16 %v240, %v239
    %v255 = vpack.c.b16 %v242, %v241
    %v256 = vpack.c.b16 %v244, %v243
    %v257 = vpack.c.b16 %v246, %v245
    %v258 = vpack.c.b16 %v248, %v247
    %v259 = vpack.c.b16 %v250, %v249
    %v260 = vpack.c.b16 %v252, %v251
    %269 = vmatprep.subr.bf16.mxu0 0
    %270 = vmatpush1.bf16.msra.mxu0 %v253
    %271 = vmatprep.subr.bf16.mxu0 0
    %272 = vmatpush1.bf16.msra.mxu0 %v254
    %273 = vmatprep.subr.bf16.mxu0 0
    %274 = vmatpush1.bf16.msra.mxu0 %v255
    %275 = vmatprep.subr.bf16.mxu0 0
    %276 = vmatpush1.bf16.msra.mxu0 %v256
    %277 = vmatprep.subr.bf16.mxu0 0
    %278 = vmatpush1.bf16.msra.mxu0 %v257
    %279 = vmatprep.subr.bf16.mxu0 0
    %280 = vmatpush1.bf16.msra.mxu0 %v258
    %281 = vmatprep.subr.bf16.mxu0 0
    %282 = vmatpush1.bf16.msra.mxu0 %v259
    %283 = vmatprep.subr.bf16.mxu0 0
    %284 = vmatpush1.bf16.msra.mxu0 %v260
    %285 = vmatprep.subr.bf16.mxu0 0
    %286 = vmatpush1.bf16.msra.mxu0 0
    %287 = vmatprep.subr.bf16.mxu0 0
    %288 = vmatpush1.bf16.msra.mxu0 0
    %289 = vmatprep.subr.bf16.mxu0 0
    %290 = vmatpush1.bf16.msra.mxu0 0
    %291 = vmatprep.subr.bf16.mxu0 0
    %292 = vmatpush1.bf16.msra.mxu0 0
    %293 = vmatprep.subr.bf16.mxu0 0
    %294 = vmatpush1.bf16.msra.mxu0 0
    %295 = vmatprep.subr.bf16.mxu0 0
    %296 = vmatpush1.bf16.msra.mxu0 0
    %297 = vmatprep.subr.bf16.mxu0 0
    %298 = vmatpush1.bf16.msra.mxu0 0
    %299 = vmatprep.subr.bf16.mxu0 0
    %300 = vmatpush1.bf16.msra.mxu0 0
    %301 = vmatprep.mubr.bf16.mxu0 0
    %302 = vmatmul.mubr.bf16.gmra.mrb[0].mxu0 %v196
    %v303 = vpop.f32.mrb[0].mxu0
    %v304 = vadd.f32 %v219, %v303
    %v305 = vpop.f32.mrb[0].mxu0
    %v306 = vpop.f32.mrb[0].mxu0
    %v307 = vadd.f32 %v219, %v306
    %v308 = vpop.f32.mrb[0].mxu0
    %309 = vmatprep.mubr.bf16.mxu0 0
    %310 = vmatmul.mubr.bf16.gmra.mrb[0].mxu0 %v197
    %v311 = vpop.f32.mrb[0].mxu0
    %v312 = vadd.f32 %v219, %v311
    %v313 = vpop.f32.mrb[0].mxu0
    %v314 = vpop.f32.mrb[0].mxu0
    %v315 = vadd.f32 %v219, %v314
    %v316 = vpop.f32.mrb[0].mxu0
    %317 = vdwg.mxu0
    %v318 = vtanh.pop %v304
    %v319 = vtanh.pop %v307
    %v320 = vtanh.pop %v312
    %v321 = vtanh.pop %v315
    %v322 = vpack.c.bf16 %v319, %v318
    %v323 = vpack.c.bf16 %v321, %v320
    %v324 = vld [vmem:[#allocation8] sm:$0xf]
    %v325 = vld [vmem:[#allocation8 + $0x4] sm:$0xf]
    %v326 = vld [vmem:[#allocation8 + $0x8] sm:$0xf]
    %v327 = vld [vmem:[#allocation8 + $0xc] sm:$0xf]
    %v328 = vld [vmem:[#allocation8 + $0x10] sm:$0xf]
    %v329 = vld [vmem:[#allocation8 + $0x14] sm:$0xf]
    %v330 = vld [vmem:[#allocation8 + $0x18] sm:$0xf]
    %v331 = vld [vmem:[#allocation8 + $0x1c] sm:$0xf]
    %v332 = vld [vmem:[#allocation8 + $0x20] sm:$0xf]
    %v333 = vld [vmem:[#allocation8 + $0x24] sm:$0xf]
    %v334 = vld [vmem:[#allocation8 + $0x28] sm:$0xf]
    %v335 = vld [vmem:[#allocation8 + $0x2c] sm:$0xf]
    %v336 = vld [vmem:[#allocation8 + $0x30] sm:$0xf]
    %v337 = vld [vmem:[#allocation8 + $0x34] sm:$0xf]
    %v338 = vld [vmem:[#allocation8 + $0x38] sm:$0xf]
    %v339 = vld [vmem:[#allocation8 + $0x3c] sm:$0xf]
    %v340 = vld [vmem:[%s6] sm:$0x1]
    %v342 = vlaneseq
    %v343 = vshrl.u32 %v342, 7
    %v344 = vsub.s32 0, %v343
    %v345 = vrot.slane %v340, %v344
    %v363 = vunpack.c.l.b16 %v324
    %v364 = vunpack.c.l.b16 %v325
    %v365 = vunpack.c.l.b16 %v326
    %v366 = vunpack.c.l.b16 %v327
    %v367 = vunpack.c.l.b16 %v328
    %v368 = vunpack.c.l.b16 %v329
    %v369 = vunpack.c.l.b16 %v330
    %v370 = vunpack.c.l.b16 %v331
    %v371 = vunpack.c.l.b16 %v332
    %v372 = vunpack.c.l.b16 %v333
    %v373 = vunpack.c.l.b16 %v334
    %v374 = vunpack.c.l.b16 %v335
    %v375 = vunpack.c.l.b16 %v336
    %v376 = vunpack.c.l.b16 %v337
    %v377 = vunpack.c.l.b16 %v338
    %v378 = vunpack.c.l.b16 %v339
    %v379 = vpack.c.b16 %v364, %v363
    %v380 = vpack.c.b16 %v366, %v365
    %v381 = vpack.c.b16 %v368, %v367
    %v382 = vpack.c.b16 %v370, %v369
    %v383 = vpack.c.b16 %v372, %v371
    %v384 = vpack.c.b16 %v374, %v373
    %v385 = vpack.c.b16 %v376, %v375
    %v386 = vpack.c.b16 %v378, %v377
    %395 = vmatprep.subr.bf16.mxu0 0
    %396 = vmatpush1.bf16.msra.mxu0 %v379
    %397 = vmatprep.subr.bf16.mxu0 0
    %398 = vmatpush1.bf16.msra.mxu0 %v380
    %399 = vmatprep.subr.bf16.mxu0 0
    %400 = vmatpush1.bf16.msra.mxu0 %v381
    %401 = vmatprep.subr.bf16.mxu0 0
    %402 = vmatpush1.bf16.msra.mxu0 %v382
    %403 = vmatprep.subr.bf16.mxu0 0
    %404 = vmatpush1.bf16.msra.mxu0 %v383
    %405 = vmatprep.subr.bf16.mxu0 0
    %406 = vmatpush1.bf16.msra.mxu0 %v384
    %407 = vmatprep.subr.bf16.mxu0 0
    %408 = vmatpush1.bf16.msra.mxu0 %v385
    %409 = vmatprep.subr.bf16.mxu0 0
    %410 = vmatpush1.bf16.msra.mxu0 %v386
    %411 = vmatprep.subr.bf16.mxu0 0
    %412 = vmatpush1.bf16.msra.mxu0 0
    %413 = vmatprep.subr.bf16.mxu0 0
    %414 = vmatpush1.bf16.msra.mxu0 0
    %415 = vmatprep.subr.bf16.mxu0 0
    %416 = vmatpush1.bf16.msra.mxu0 0
    %417 = vmatprep.subr.bf16.mxu0 0
    %418 = vmatpush1.bf16.msra.mxu0 0
    %419 = vmatprep.subr.bf16.mxu0 0
    %420 = vmatpush1.bf16.msra.mxu0 0
    %421 = vmatprep.subr.bf16.mxu0 0
    %422 = vmatpush1.bf16.msra.mxu0 0
    %423 = vmatprep.subr.bf16.mxu0 0
    %424 = vmatpush1.bf16.msra.mxu0 0
    %425 = vmatprep.subr.bf16.mxu0 0
    %426 = vmatpush1.bf16.msra.mxu0 0
    %427 = vmatprep.mubr.bf16.mxu0 0
    %428 = vmatmul.mubr.bf16.gmra.mrb[0].mxu0 %v322
    %v429 = vpop.f32.mrb[0].mxu0
    %v430 = vadd.f32 %v345, %v429
    %v431 = vpop.f32.mrb[0].mxu0
    %v432 = vpop.f32.mrb[0].mxu0
    %v433 = vadd.f32 %v345, %v432
    %v434 = vpop.f32.mrb[0].mxu0
    %435 = vmatprep.mubr.bf16.mxu0 0
    %436 = vmatmul.mubr.bf16.gmra.mrb[0].mxu0 %v323
    %v437 = vpop.f32.mrb[0].mxu0
    %v438 = vadd.f32 %v345, %v437
    %v439 = vpop.f32.mrb[0].mxu0
    %v440 = vpop.f32.mrb[0].mxu0
    %v441 = vadd.f32 %v345, %v440
    %v442 = vpop.f32.mrb[0].mxu0
    %443 = vdwg.mxu0
    %444 = vst [vmem:[#allocation10] sm:$0xff] %v430
    %445 = vst [vmem:[#allocation10 + $0x8] sm:$0xff] %v433
    %446 = vst [vmem:[#allocation10 + $0x10] sm:$0xff] %v438
    %447 = vst [vmem:[#allocation10 + $0x18] sm:$0xff] %v441
    // Predicated region
    $region46: #{tpu_custom_call.1} parent=1 // pred_check
      _
    $region47: #{tpu_custom_call.1} parent=1 // pred_check_branch
      %449 = sbr.rel (0) target = $region49
    $region48: #{tpu_custom_call.1} parent=1 // pred_region
      %s451 = ssub.s32 512, 512
      %452 = vsyncadd [#allocation4], %s451
      %s453 = sshll.u32 [#allocation10], 4
      %s454 = int_to_ptr.vmem [resolvable:$true] %s453
      %459 = dma.vmem_to_hbm [thread:$0]  %s454, 512, %s7, [#allocation4], 128, 128, 8
    $region49: #{tpu_custom_call.1} parent=1 // pred_fallthru
      _
    // Predicated region
    $region50: #{tpu_custom_call.1} parent=1 // pred_check
      _
    $region51: #{tpu_custom_call.1} parent=1 // pred_check_branch
      %461 = sbr.rel (0) target = $region53
    $region52: #{tpu_custom_call.1} parent=1 // pred_region
      %462 = dma.done [#allocation4], 512
    $region53: #{tpu_custom_call.1} parent=1 // pred_fallthru
      _
    %463 = vsyncpa [#allocation3], 1
    %464 = vsyncpa [#allocation6], 1
    %465 = vsyncpa [#allocation9], 1
    %466 = vsyncpa [#allocation4], 1

</llo_original>
